<compile_context>
chip_gen: v5e
topology: v5e:2x2
jax: 0.10.0
libtpu: 0.0.40
codegen_flags: <defaults>
</compile_context>

<pallas_src>
import functools

import jax
import jax.numpy as jnp
from jax import lax
from jax.experimental import pallas as pl
from jax.experimental.pallas import tpu as pltpu


def _tv_kernel(x_ref, hscale_ref, wscale_ref, o_ref, *,
               height, width, tb, rows_total, fold_lanes):
    """One grid step over a (tb, H*W) slab of flattened (b, c) image rows.

    Each row is one (H, W) image laid out lane-dense as H*W. Neighbour
    differences are formed with lane rolls; the per-position 1/count scaling
    and validity masks live in the precomputed hscale/wscale inputs.
    """
    hw = height * width
    nslabs = tb // 8
    need_row_mask = (rows_total % tb) != 0          # static
    out_lanes = 128 if fold_lanes else hw

    hs = hscale_ref[...]                             # (1, hw) f32
    ws = wscale_ref[...]                             # (1, hw) f32

    def slab_contrib(s):
        start = pl.multiple_of(s * 8, 8)
        slab = x_ref[pl.ds(start, 8), :].astype(jnp.float32)    # (8, hw)
        if need_row_mask:
            # Ragged last block: rows past the real array are undefined.
            row = (pl.program_id(0) * tb + start
                   + lax.broadcasted_iota(jnp.int32, (8, hw), 0))
            slab = jnp.where(row < rows_total, slab, 0.0)

        terms = []
        if height > 1:
            # x[(p + W) mod HW] at position p == next image row, same column.
            d_h = pltpu.roll(slab, hw - width, axis=1) - slab
            terms.append(d_h * d_h * hs)
        if width > 1:
            # x[(p + 1) mod HW] at position p == next column (wrap masked out).
            d_w = pltpu.roll(slab, hw - 1, axis=1) - slab
            terms.append(d_w * d_w * ws)
        if not terms:
            terms = [jnp.zeros((8, hw), jnp.float32)]

        contrib = terms[0]
        for t in terms[1:]:
            contrib = contrib + t

        if fold_lanes:
            # Fold 128-lane chunks together: pure vreg adds, tile-aligned slices.
            folded = contrib[:, 0:128]
            for c in range(1, hw // 128):
                folded = folded + contrib[:, c * 128:(c + 1) * 128]
            return folded
        return contrib

    def body(s, acc):
        return acc + slab_contrib(s)

    init = jnp.zeros((8, out_lanes), jnp.float32)
    unroll = nslabs if nslabs <= 8 else 4
    acc = lax.fori_loop(0, nslabs, body, init, unroll=unroll)
    o_ref[...] = acc[None, :, :]                     # (1, 8, out_lanes)


def tv_loss(x, tv_loss_weight=1.0):
    """TV loss matching PyTorch TVLoss.forward. x: (B, C, H, W) -> scalar f32."""
    B, C, H, W = x.shape
    HW = H * W
    BC = B * C
    itemsize = jnp.dtype(x.dtype).itemsize

    # ---- flatten; pad rows only when B*C is not a multiple of 8 ------------
    xf = x.reshape(BC, HW)
    R = BC
    if BC % 8 != 0:
        pad = (-BC) % 8
        xf = jnp.concatenate([xf, jnp.zeros((pad, HW), xf.dtype)], axis=0)
        R = BC + pad                                  # zero rows contribute 0

    # ---- tiling: ~2 MiB input blocks over the row axis ---------------------
    target_block_bytes = 2 * 1024 * 1024
    bytes_per_group = 8 * HW * itemsize               # one 8-row slab
    groups_total = R // 8
    groups_per_block = max(1, min(groups_total,
                                  target_block_bytes // bytes_per_group))
    nb = pl.cdiv(groups_total, groups_per_block)
    if nb == 1 and groups_total >= 2:
        # v7x megacore: give the parallel grid axis at least 2 steps.
        groups_per_block = pl.cdiv(groups_total, 2)
        nb = pl.cdiv(groups_total, groups_per_block)
    tb = groups_per_block * 8

    fold_lanes = (HW % 128 == 0)
    out_lanes = 128 if fold_lanes else HW

    # ---- precomputed lane masks with 1/count folded in (no in-kernel mod) --
    lane = jnp.arange(HW, dtype=jnp.int32)
    if H > 1:
        count_h = C * (H - 1) * W
        hscale = jnp.where(lane < HW - W, jnp.float32(1.0 / count_h),
                           jnp.float32(0.0))
    else:
        hscale = jnp.zeros((HW,), jnp.float32)        # guard 0-division (H==1)
    if W > 1:
        count_w = C * H * (W - 1)
        wscale = jnp.where(lane % W != W - 1, jnp.float32(1.0 / count_w),
                           jnp.float32(0.0))
    else:
        wscale = jnp.zeros((HW,), jnp.float32)        # guard 0-division (W==1)
    hscale = hscale.reshape(1, HW)
    wscale = wscale.reshape(1, HW)

    kernel = functools.partial(_tv_kernel, height=H, width=W, tb=tb,
                               rows_total=R, fold_lanes=fold_lanes)

    partials = pl.pallas_call(
        kernel,
        out_shape=jax.ShapeDtypeStruct((nb, 8, out_lanes), jnp.float32),
        grid=(nb,),
        in_specs=[
            pl.BlockSpec((tb, HW), lambda i: (i, 0)),
            pl.BlockSpec((1, HW), lambda i: (0, 0)),
            pl.BlockSpec((1, HW), lambda i: (0, 0)),
        ],
        out_specs=pl.BlockSpec((1, 8, out_lanes), lambda i: (i, 0, 0)),
        compiler_params=pltpu.CompilerParams(
            dimension_semantics=("parallel",),        # independent blocks
            vmem_limit_bytes=32 * 1024 * 1024,
        ),
        cost_estimate=pl.CostEstimate(
            flops=8 * B * C * H * W,
            transcendentals=0,
            bytes_accessed=(R * HW * itemsize
                            + nb * 8 * out_lanes * 4 + 2 * HW * 4),
        ),
    )(xf, hscale, wscale)

    # Partials already carry 1/count_h and 1/count_w; finish the scalar math.
    total = jnp.sum(partials)
    return jnp.float32(tv_loss_weight) * 2.0 * total / B


if __name__ == "__main__":
    key = jax.random.PRNGKey(0)
    B, C, H, W = 2, 4, 16, 16
    x = jax.random.normal(key, (B, C, H, W), dtype=jnp.float32)

    loss = tv_loss(x, tv_loss_weight=1.0)
    loss = jax.block_until_ready(loss)

    # Pure-JAX reference (same math as the PyTorch module).
    h_tv_ref = jnp.sum((x[:, :, 1:, :] - x[:, :, :-1, :]) ** 2)
    w_tv_ref = jnp.sum((x[:, :, :, 1:] - x[:, :, :, :-1]) ** 2)
    ref = 2.0 * (h_tv_ref / (C * (H - 1) * W)
                 + w_tv_ref / (C * H * (W - 1))) / B
    assert jnp.allclose(loss, ref, rtol=1e-4, atol=1e-6), (loss, ref)

    print("KERNEL_OK")
</pallas_src>

<mosaic_0001>
module attributes {stable_mosaic.version = 11 : i64} {
  func.func @_tv_kernel(%arg0: i32, %arg1: memref<8x256xf32, #tpu.memory_space<vmem>>, %arg2: memref<1x256xf32, #tpu.memory_space<vmem>>, %arg3: memref<1x256xf32, #tpu.memory_space<vmem>>, %arg4: memref<1x8x128xf32, #tpu.memory_space<vmem>>) attributes {dimension_semantics = [#tpu.dimension_semantics<parallel>], iteration_bounds = array<i64: 1>, scalar_prefetch = 0 : i64, scratch_operands = 0 : i64, tpu.core_type = #tpu.core_type<tc>, window_params = [{transform_indices = @transform_0, window_bounds = array<i64: 8, 256>}, {pipeline_mode = #tpu.pipeline_mode<synchronous>, transform_indices = @transform_1, window_bounds = array<i64: 1, 256>}, {pipeline_mode = #tpu.pipeline_mode<synchronous>, transform_indices = @transform_2, window_bounds = array<i64: 1, 256>}, {transform_indices = @transform_3, window_bounds = array<i64: 1, 8, 128>}]} {
    %c0 = arith.constant 0 : index
    %c0_0 = arith.constant 0 : index
    %0 = vector.load %arg2[%c0, %c0_0] : memref<1x256xf32, #tpu.memory_space<vmem>>, vector<1x256xf32>
    %c0_1 = arith.constant 0 : index
    %c0_2 = arith.constant 0 : index
    %1 = vector.load %arg3[%c0_1, %c0_2] : memref<1x256xf32, #tpu.memory_space<vmem>>, vector<1x256xf32>
    %cst = arith.constant 0.000000e+00 : f32
    %2 = vector.broadcast %cst : f32 to vector<8x128xf32>
    %c0_i32 = arith.constant 0 : i32
    %c8_i32 = arith.constant 8 : i32
    %3 = arith.muli %c0_i32, %c8_i32 : i32
    %4 = tpu.assume_multiple %3, 8 : i32
    %5 = arith.index_cast %4 : i32 to index
    %c0_3 = arith.constant 0 : index
    %6 = vector.load %arg1[%5, %c0_3] : memref<8x256xf32, #tpu.memory_space<vmem>>, vector<8x256xf32>
    %c240_i32 = arith.constant 240 : i32
    %7 = tpu.dynamic_rotate %6 by %c240_i32 dim 1 : vector<8x256xf32>, i32 -> vector<8x256xf32>
    %8 = arith.subf %7, %6 : vector<8x256xf32>
    %9 = arith.mulf %8, %8 : vector<8x256xf32>
    %10 = vector.broadcast %0 : vector<1x256xf32> to vector<8x256xf32>
    %11 = arith.mulf %9, %10 : vector<8x256xf32>
    %c255_i32 = arith.constant 255 : i32
    %12 = tpu.dynamic_rotate %6 by %c255_i32 dim 1 : vector<8x256xf32>, i32 -> vector<8x256xf32>
    %13 = arith.subf %12, %6 : vector<8x256xf32>
    %14 = arith.mulf %13, %13 : vector<8x256xf32>
    %15 = vector.broadcast %1 : vector<1x256xf32> to vector<8x256xf32>
    %16 = arith.mulf %14, %15 : vector<8x256xf32>
    %17 = arith.addf %11, %16 : vector<8x256xf32>
    %18 = vector.extract_strided_slice %17 {offsets = [0, 0], sizes = [8, 128], strides = [1, 1]} : vector<8x256xf32> to vector<8x128xf32>
    %19 = vector.extract_strided_slice %17 {offsets = [0, 128], sizes = [8, 128], strides = [1, 1]} : vector<8x256xf32> to vector<8x128xf32>
    %20 = arith.addf %18, %19 : vector<8x128xf32>
    %21 = arith.addf %2, %20 : vector<8x128xf32>
    %c1_i32 = arith.constant 1 : i32
    %22 = vector.shape_cast %21 : vector<8x128xf32> to vector<1x8x128xf32>
    %c0_4 = arith.constant 0 : index
    %c0_5 = arith.constant 0 : index
    %c0_6 = arith.constant 0 : index
    %23 = vector.load %arg4[%c0_4, %c0_5, %c0_6] : memref<1x8x128xf32, #tpu.memory_space<vmem>>, vector<1x8x128xf32>
    tpu.vector_store %arg4[%c0_4, %c0_5, %c0_6], %22 {strides = array<i32>} : memref<1x8x128xf32, #tpu.memory_space<vmem>>, vector<1x8x128xf32>,
    return
  }
  func.func @transform_0(%arg0: i32) -> (i32, i32) {
    %c0_i32 = arith.constant 0 : i32
    %c0_i32_0 = arith.constant 0 : i32
    return %arg0, %c0_i32 : i32, i32
  }
  func.func @transform_1(%arg0: i32) -> (i32, i32) {
    %c0_i32 = arith.constant 0 : i32
    %c0_i32_0 = arith.constant 0 : i32
    %c0_i32_1 = arith.constant 0 : i32
    return %c0_i32, %c0_i32_0 : i32, i32
  }
  func.func @transform_2(%arg0: i32) -> (i32, i32) {
    %c0_i32 = arith.constant 0 : i32
    %c0_i32_0 = arith.constant 0 : i32
    %c0_i32_1 = arith.constant 0 : i32
    return %c0_i32, %c0_i32_0 : i32, i32
  }
  func.func @transform_3(%arg0: i32) -> (i32, i32, i32) {
    %c0_i32 = arith.constant 0 : i32
    %c0_i32_0 = arith.constant 0 : i32
    %c0_i32_1 = arith.constant 0 : i32
    return %arg0, %c0_i32, %c0_i32_0 : i32, i32, i32
  }
}

</mosaic_0001>

<llo_original>
// kernel: tpu_custom_call.1
$region0: #{tpu_custom_call.1}
  #allocation0 [shape = 'u32[]', space=smem, size = 0x4, offset = 0x4, fixed_abs, tag = 'smem constant byte address 0x4 - core index']
  #allocation1 [shape = 'u32[72,128]{1,0:T(1,128)}', space=vmem, size = 0x9000, scoped, tag = 'internal scratch']
  %s0 = inlined_call_operand.hbm [shape: f32[8,256], index: 0, kind: input, shape index: {}]
  %s1 = inlined_call_operand.hbm [shape: f32[1,256], index: 1, kind: input, shape index: {}]
  %s2 = inlined_call_operand.hbm [shape: f32[1,256], index: 2, kind: input, shape index: {}]
  %s3 = inlined_call_operand.hbm [shape: f32[1,8,128], index: 3, kind: output, shape index: {}]
  %s4 = sld [smem:[#allocation0]]
  $region34: #{tpu_custom_call.1} parent=0
    _
  %s6 = ssub.s32 1, %s4
  %s7 = scalar_select 0, %s6, %s4
  $region1: #{tpu_custom_call.1} parent=0
    #allocation2 [shape = 'u8[8192]{0}', space=vmem, size = 0x2000, scoped, tag = 'input window, operand 0, single buffered']
    #allocation3 [shape = 's32[1]{0}', space=sflag, size = 0x4, scoped, tag = 'scoped memory for tpu_custom_call.1']
    #allocation4 [shape = 's32[1]{0}', space=sflag, size = 0x4, scoped, tag = 'scoped memory for tpu_custom_call.1']
    #allocation5 [shape = 'u8[1024]{0}', space=vmem, size = 0x400, scoped, tag = 'input window, operand 1, single buffered']
    #allocation6 [shape = 's32[1]{0}', space=sflag, size = 0x4, scoped, tag = 'scoped memory for tpu_custom_call.1']
    #allocation7 [shape = 'u8[1024]{0}', space=vmem, size = 0x400, scoped, tag = 'input window, operand 2, single buffered']
    #allocation8 [shape = 'u8[4096]{0}', space=vmem, size = 0x1000, scoped, tag = 'output window, operand 0, single buffered']
    %8 = vsyncpa [#allocation3], 0
    %9 = vsyncpa [#allocation6], 0
    %10 = vsyncpa [#allocation4], 0
    // Predicated region
    $region2: #{tpu_custom_call.1} parent=1 // pred_check
      _
    $region3: #{tpu_custom_call.1} parent=1 // pred_check_branch
      %12 = sbr.rel (0) target = $region5
    $region4: #{tpu_custom_call.1} parent=1 // pred_region
      %14 = vsyncadd [#allocation3], 0
      %s16 = sshll.u32 %s0, 4
      %s17 = int_to_ptr.hbm [resolvable:$true] %s16
      %s18 = sshll.u32 [#allocation2], 4
      %s19 = int_to_ptr.vmem [resolvable:$true] %s18
      %21 = dma.hbm_to_vmem [thread:$0]  %s17, 256, %s19, [#allocation3]
    $region5: #{tpu_custom_call.1} parent=1 // pred_fallthru
      _
    // Predicated region
    $region6: #{tpu_custom_call.1} parent=1 // pred_check
      _
    $region7: #{tpu_custom_call.1} parent=1 // pred_check_branch
      %23 = sbr.rel (0) target = $region9
    $region8: #{tpu_custom_call.1} parent=1 // pred_region
      %25 = vsyncadd [#allocation6], 0
      %s27 = sshll.u32 %s1, 4
      %s28 = int_to_ptr.hbm [resolvable:$true] %s27
      %s29 = sshll.u32 [#allocation5], 4
      %s30 = int_to_ptr.vmem [resolvable:$true] %s29
      %32 = dma.hbm_to_vmem [thread:$0]  %s28, 32, %s30, [#allocation6]
    $region9: #{tpu_custom_call.1} parent=1 // pred_fallthru
      _
    // Predicated region
    $region10: #{tpu_custom_call.1} parent=1 // pred_check
      _
    $region11: #{tpu_custom_call.1} parent=1 // pred_check_branch
      %34 = sbr.rel (0) target = $region13
    $region12: #{tpu_custom_call.1} parent=1 // pred_region
      %36 = vsyncadd [#allocation6], 0
      %s38 = sshll.u32 %s2, 4
      %s39 = int_to_ptr.hbm [resolvable:$true] %s38
      %s40 = sshll.u32 [#allocation7], 4
      %s41 = int_to_ptr.vmem [resolvable:$true] %s40
      %43 = dma.hbm_to_vmem [thread:$0]  %s39, 32, %s41, [#allocation6]
    $region13: #{tpu_custom_call.1} parent=1 // pred_fallthru
      _
    // Predicated region
    $region14: #{tpu_custom_call.1} parent=1 // pred_check
      _
    $region15: #{tpu_custom_call.1} parent=1 // pred_check_branch
      %45 = sbr.rel (0) target = $region17
    $region16: #{tpu_custom_call.1} parent=1 // pred_region
      %47 = dma.done [#allocation3], 256
    $region17: #{tpu_custom_call.1} parent=1 // pred_fallthru
      _
    // Predicated region
    $region18: #{tpu_custom_call.1} parent=1 // pred_check
      _
    $region19: #{tpu_custom_call.1} parent=1 // pred_check_branch
      %49 = sbr.rel (0) target = $region21
    $region20: #{tpu_custom_call.1} parent=1 // pred_region
      %51 = dma.done [#allocation6], 32
    $region21: #{tpu_custom_call.1} parent=1 // pred_fallthru
      _
    // Predicated region
    $region22: #{tpu_custom_call.1} parent=1 // pred_check
      _
    $region23: #{tpu_custom_call.1} parent=1 // pred_check_branch
      %53 = sbr.rel (0) target = $region25
    $region24: #{tpu_custom_call.1} parent=1 // pred_region
      %55 = dma.done [#allocation6], 32
    $region25: #{tpu_custom_call.1} parent=1 // pred_fallthru
      _
    %v56 = vld [vmem:[#allocation5] sm:$0x3]
    %v57 = vld [vmem:[#allocation7] sm:$0x3]
    %s58 = smul.u32 0, 2
    %s59 = smul.addr %s58, 8
    %s60 = scalar_lea.vmem [#allocation2], %s59
    %v61 = vld [vmem:[%s60] sm:$0xff]
    %v62 = vld [vmem:[%s60 + $0x8] sm:$0xff]
    %63 = vrot.lane.b32.xlu0 %v61, 112
    %v64 = vpop.permute.xlu0 %63
    %65 = vrot.lane.b32.xlu0 %v62, 112
    %v66 = vpop.permute.xlu0 %65
    %v67 = vlaneseq
    %v68 = vand.u32 %v67, 127
    %vm69 = vcmp.lt.s32.totalorder %v68, 112
    %v70 = vsel %vm69, %v64, %v66
    %v71 = vsel %vm69, %v66, %v64
    %v72 = vsub.f32 %v70, %v61
    %v73 = vsub.f32 %v71, %v62
    %v74 = vmul.f32 %v72, %v72
    %v75 = vmul.f32 %v73, %v73
    %v77 = vperm.slane %v56, 0
    %v78 = vperm.slane %v56, 1
    %v81 = vmul.f32 %v74, %v77
    %v82 = vmul.f32 %v75, %v78
    %83 = vrot.lane.b32.xlu0 %v61, 127
    %v84 = vpop.permute.xlu0 %83
    %85 = vrot.lane.b32.xlu0 %v62, 127
    %v86 = vpop.permute.xlu0 %85
    %vm87 = vcmp.lt.s32.totalorder %v68, 127
    %v88 = vsel %vm87, %v84, %v86
    %v89 = vsel %vm87, %v86, %v84
    %v90 = vsub.f32 %v88, %v61
    %v91 = vsub.f32 %v89, %v62
    %v92 = vmul.f32 %v90, %v90
    %v93 = vmul.f32 %v91, %v91
    %v95 = vperm.slane %v57, 0
    %v96 = vperm.slane %v57, 1
    %v99 = vmul.f32 %v92, %v95
    %v100 = vmul.f32 %v93, %v96
    %v101 = vadd.f32 %v81, %v99
    %v102 = vadd.f32 %v82, %v100
    %v103 = vadd.f32 %v101, %v102
    %v104 = vadd.f32 %v103, 0.0
    %105 = vst [vmem:[#allocation8] sm:$0xff] %v104
    // Predicated region
    $region26: #{tpu_custom_call.1} parent=1 // pred_check
      _
    $region27: #{tpu_custom_call.1} parent=1 // pred_check_branch
      %107 = sbr.rel (0) target = $region29
    $region28: #{tpu_custom_call.1} parent=1 // pred_region
      %109 = vsyncadd [#allocation4], 0
      %s111 = sshll.u32 [#allocation8], 4
      %s112 = int_to_ptr.vmem [resolvable:$true] %s111
      %s113 = sshll.u32 %s3, 4
      %s114 = int_to_ptr.hbm [resolvable:$true] %s113
      %116 = dma.vmem_to_hbm [thread:$0]  %s112, 128, %s114, [#allocation4]
    $region29: #{tpu_custom_call.1} parent=1 // pred_fallthru
      _
    // Predicated region
    $region30: #{tpu_custom_call.1} parent=1 // pred_check
      _
    $region31: #{tpu_custom_call.1} parent=1 // pred_check_branch
      %118 = sbr.rel (0) target = $region33
    $region32: #{tpu_custom_call.1} parent=1 // pred_region
      %120 = dma.done [#allocation4], 128
    $region33: #{tpu_custom_call.1} parent=1 // pred_fallthru
      _
    %121 = vsyncpa [#allocation3], 1
    %122 = vsyncpa [#allocation6], 1
    %123 = vsyncpa [#allocation4], 1

</llo_original>
